<compile_context>
chip_gen: v6e
topology: v6e:2x2x1
jax: 0.10.0
libtpu: 0.0.40
codegen_flags: <defaults>
</compile_context>

<pallas_src>
import functools

import jax
import jax.numpy as jnp
from jax.experimental import pallas as pl
from jax.experimental.pallas import tpu as pltpu

# Deterministic "parameters" from the module's __init__ (no checkpoint load).
TARGET = 0.0457          # Maze2dTargetYGuide default target
DISTANCE_TYPE = "l2"     # module reads kwargs['distance_type']; 'l2' -> .abs()

# Default batch block: 4 KiB lane-padded per batch row -> 4 MiB / buffer at
# 1024 rows, 8 MiB double-buffered; fits default scoped VMEM on v5e/v6e/v7x.
_DEFAULT_BATCH_BLOCK = 1024


def _sublane_tile(dtype):
    """Native sublane tile rows for this dtype: 8 (f32), 16 (bf16/f16), 32 (8-bit)."""
    itemsize = jnp.dtype(dtype).itemsize
    return 8 * max(1, 4 // itemsize)


def _maze2d_target_y_kernel(x_ref, o_ref, *, row, target, distance_type):
    # x_ref: (BB, TB, 6) block whose sublane `row` is the last timestep.
    # o_ref: (BB, 1) float32.
    pos_y = x_ref[:, row, 3:4].astype(jnp.float32)          # (BB, 1), one lane
    if distance_type == "l1":
        # torch: sqrt((y - t)**2)  ==  |y - t|  (exact, no EUP sqrt, no underflow)
        val = jnp.abs(pos_y - jnp.float32(target))
    else:
        # torch: ((y - t)**2).abs(); the square is already >= 0 -> abs omitted
        d = pos_y - jnp.float32(target)
        val = d * d
    o_ref[...] = (-val).astype(o_ref.dtype)                 # forward returns -value


def maze2d_target_y_forward(x, cond=None, t=None, *, target=TARGET,
                            distance_type=DISTANCE_TYPE, batch_block=None):
    """Pallas equivalent of Maze2dTargetYGuide.forward. x: (B, T, 6) -> (B,) f32."""
    del cond, t  # unused by the reference forward
    B, T, D = x.shape

    # Time-axis block: one native sublane tile containing timestep T-1
    # (full T when T < tile, which satisfies the full-dim tiling rule).
    TB = _sublane_tile(x.dtype)
    if T < TB:
        TB = T
    t_blk = (T - 1) // TB          # block index containing the last timestep
    row = (T - 1) - t_blk * TB     # row of timestep T-1 inside that block

    # Batch-axis block.  If it is a real sub-block of B, keep it a multiple of
    # 8 so the (BB, 1) output block satisfies the sublane tiling rule.
    BB = min(batch_block if batch_block is not None else _DEFAULT_BATCH_BLOCK, B)
    if BB < B:
        BB = max(8, (BB // 8) * 8)
        if BB >= B:
            BB = B
    grid = (pl.cdiv(B, BB),)

    kernel = functools.partial(
        _maze2d_target_y_kernel,
        row=row, target=float(target), distance_type=distance_type,
    )
    out = pl.pallas_call(
        kernel,
        out_shape=jax.ShapeDtypeStruct((B, 1), jnp.float32),
        grid=grid,
        in_specs=[pl.BlockSpec((BB, TB, D), lambda b: (b, t_blk, 0))],
        out_specs=pl.BlockSpec((BB, 1), lambda b: (b, 0)),
        compiler_params=pltpu.CompilerParams(
            dimension_semantics=("parallel",)),   # 2-TC split on v7x; no-op elsewhere
    )(x)  # native dtype in; only the (BB, 1) y-slice is cast to f32 in-kernel
    return out[:, 0]  # (B,)


def _reference_forward(x, target=TARGET, distance_type=DISTANCE_TYPE):
    xf = x.astype(jnp.float32)
    pos_y = xf[:, -1, 3]
    if distance_type == "l1":
        d = jnp.abs(pos_y - jnp.float32(target))
    else:
        d = (pos_y - jnp.float32(target)) ** 2
    return -d


if __name__ == "__main__":
    key = jax.random.PRNGKey(0)
    # (batch_size, trace_length, 6) cases exercise: T multiple of the tile,
    # T < tile (full-dim block), T not a multiple of the tile (partial block),
    # a multi-step batch grid (batch_block < B), and a bf16 input (TB = 16).
    cases = [
        ((4, 16, 6), jnp.float32, None),
        ((3, 5, 6), jnp.float32, None),
        ((4, 11, 6), jnp.float32, None),
        ((16, 12, 6), jnp.float32, 8),     # grid of 2 batch blocks
        ((4, 16, 6), jnp.bfloat16, None),  # dtype-aware TB
    ]
    for (B, T, D), dtype, bb in cases:
        key, sub = jax.random.split(key)
        x = jax.random.normal(sub, (B, T, D), dtype=jnp.float32).astype(dtype)
        for dist_type in ("l2", "l1"):
            y = maze2d_target_y_forward(x, None, None,
                                        distance_type=dist_type,
                                        batch_block=bb)
            y = jax.block_until_ready(y)
            y_ref = _reference_forward(x, distance_type=dist_type)
            assert y.shape == (B,), (y.shape, B)
            assert jnp.allclose(y, y_ref, atol=1e-6, rtol=1e-6), \
                (B, T, dtype, dist_type, y, y_ref)
    print("KERNEL_OK")
</pallas_src>

<mosaic_0001>
module attributes {stable_mosaic.version = 11 : i64} {
  func.func @_maze2d_target_y_kernel(%arg0: i32, %arg1: memref<4x8x6xf32, #tpu.memory_space<vmem>>, %arg2: memref<4x1xf32, #tpu.memory_space<vmem>>) attributes {dimension_semantics = [#tpu.dimension_semantics<parallel>], iteration_bounds = array<i64: 1>, scalar_prefetch = 0 : i64, scratch_operands = 0 : i64, tpu.core_type = #tpu.core_type<tc>, window_params = [{transform_indices = @transform_0, window_bounds = array<i64: 4, 8, 6>}, {transform_indices = @transform_1, window_bounds = array<i64: 4, 1>}]} {
    %c0 = arith.constant 0 : index
    %c7 = arith.constant 7 : index
    %c3 = arith.constant 3 : index
    %0 = vector.load %arg1[%c0, %c7, %c3] : memref<4x8x6xf32, #tpu.memory_space<vmem>>, vector<4x1x1xf32>
    %1 = vector.shape_cast %0 : vector<4x1x1xf32> to vector<4x1xf32>
    %cst = arith.constant 4.570000e-02 : f32
    %2 = vector.broadcast %cst : f32 to vector<4x1xf32>
    %3 = arith.subf %1, %2 : vector<4x1xf32>
    %4 = arith.mulf %3, %3 : vector<4x1xf32>
    %cst_0 = arith.constant 0.000000e+00 : f32
    %5 = vector.broadcast %cst_0 : f32 to vector<4x1xf32>
    %6 = arith.subf %5, %4 : vector<4x1xf32>
    %c0_1 = arith.constant 0 : index
    %c0_2 = arith.constant 0 : index
    %7 = vector.load %arg2[%c0_1, %c0_2] : memref<4x1xf32, #tpu.memory_space<vmem>>, vector<4x1xf32>
    tpu.vector_store %arg2[%c0_1, %c0_2], %6 {strides = array<i32>} : memref<4x1xf32, #tpu.memory_space<vmem>>, vector<4x1xf32>,
    return
  }
  func.func @transform_0(%arg0: i32) -> (i32, i32, i32) {
    %c1_i32 = arith.constant 1 : i32
    %c0_i32 = arith.constant 0 : i32
    %c0_i32_0 = arith.constant 0 : i32
    return %arg0, %c1_i32, %c0_i32 : i32, i32, i32
  }
  func.func @transform_1(%arg0: i32) -> (i32, i32) {
    %c0_i32 = arith.constant 0 : i32
    %c0_i32_0 = arith.constant 0 : i32
    return %arg0, %c0_i32 : i32, i32
  }
}

</mosaic_0001>

<llo_original>
// kernel: tpu_custom_call.1
$region0: #{tpu_custom_call.1}
  #allocation0 [shape = 'u32[]', space=smem, size = 0x4, offset = 0x4, fixed_abs, tag = 'smem constant byte address 0x4 - core index']
  #allocation1 [shape = 'u32[144,128]{1,0:T(1,128)}', space=vmem, size = 0x12000, scoped, tag = 'internal scratch']
  %s0 = inlined_call_operand.vmem [shape: f32[4,16,6], index: 0, kind: input, shape index: {}]
  %s1 = inlined_call_operand.vmem [shape: f32[4,1], index: 1, kind: output, shape index: {}]
  %s2 = sld [smem:[#allocation0]]
  $region52: #{tpu_custom_call.1} parent=0
    _
  %s4 = ssub.s32 1, %s2
  %s5 = scalar_select 0, %s4, %s2
  $region1: #{tpu_custom_call.1} parent=0
    #allocation2 [shape = 'u8[16384]{0}', space=vmem, size = 0x4000, scoped, tag = 'input window, operand 0, single buffered']
    // Predicated region
    $region2: #{tpu_custom_call.1} parent=1 // pred_check
      _
    $region3: #{tpu_custom_call.1} parent=1 // pred_check_branch
      %7 = sbr.rel (0) target = $region5
    $region4: #{tpu_custom_call.1} parent=1 // pred_region
      %s8 = scalar_lea.vmem %s0, 8
      // Predicated region
      $region6: #{tpu_custom_call.1} parent=4 // pred_check
        _
      $region7: #{tpu_custom_call.1} parent=4 // pred_check_branch
        %10 = sbr.rel (0) target = $region9
      $region8: #{tpu_custom_call.1} parent=4 // pred_region
        // Predicated region
        $region10: #{tpu_custom_call.1} parent=8 // pred_check
          _
        $region11: #{tpu_custom_call.1} parent=8 // pred_check_branch
          %12 = sbr.rel (0) target = $region13
        $region12: #{tpu_custom_call.1} parent=8 // pred_region
          // Predicated region
          $region25: #{tpu_custom_call.1} parent=12 // pred_check
            _
          $region26: #{tpu_custom_call.1} parent=12 // pred_check_branch
            %34 = sbr.rel (0) target = $region28
          $region27: #{tpu_custom_call.1} parent=12 // pred_region
            loop: start=0, step=1, limit=1
            $region29: #{tpu_custom_call.1} parent=27 // loop_pre_header
              _
            $region30: #{tpu_custom_call.1} parent=27 // loop_header
              %s36 = sphi 0, %s40
              %p37 = scmp.ge.s32.totalorder %s36, 1
              %s41 = sphi %s8, %s8
              %s42 = sphi [#allocation2], [#allocation2]
            $region31: #{tpu_custom_call.1} parent=27 // loop_header_branch
              %39 = sbr.rel (%p37) target = $region35
            $region32: #{tpu_custom_call.1} parent=27 // loop_body
              %v43 = vld [vmem:[%s41] sm:$0xff]
              %44 = vst [vmem:[%s42] sm:$0xff] %v43
              %v45 = vld [vmem:[%s41 + $0x10] sm:$0xff]
              %46 = vst [vmem:[%s42 + $0x8] sm:$0xff] %v45
              %v47 = vld [vmem:[%s41 + $0x20] sm:$0xff]
              %48 = vst [vmem:[%s42 + $0x10] sm:$0xff] %v47
              %v49 = vld [vmem:[%s41 + $0x30] sm:$0xff]
              %50 = vst [vmem:[%s42 + $0x18] sm:$0xff] %v49
            $region33: #{tpu_custom_call.1} parent=27 // loop_footer
              %s40 = sadd.s32 1, %s36
            $region34: #{tpu_custom_call.1} parent=27 // loop_footer_branch
              %35 = sbr.rel target = $region30
            $region35: #{tpu_custom_call.1} parent=27 // loop_exit
              _
          $region28: #{tpu_custom_call.1} parent=12 // pred_fallthru
            _
          // Predicated region
          $region36: #{tpu_custom_call.1} parent=12 // pred_check
            _
          $region37: #{tpu_custom_call.1} parent=12 // pred_check_branch
            %52 = sbr.rel target = $region39
          $region38: #{tpu_custom_call.1} parent=12 // pred_region
            _
          $region39: #{tpu_custom_call.1} parent=12 // pred_fallthru
            _
        $region13: #{tpu_custom_call.1} parent=8 // pred_fallthru
          _
        // Predicated region
        $region14: #{tpu_custom_call.1} parent=8 // pred_check
          _
        $region15: #{tpu_custom_call.1} parent=8 // pred_check_branch
          %14 = sbr.rel target = $region17
        $region16: #{tpu_custom_call.1} parent=8 // pred_region
          %s16 = ssub.s32 256, 1
          loop: start=0, step=1, limit=1
          $region18: #{tpu_custom_call.1} parent=16 // loop_pre_header
            _
          $region19: #{tpu_custom_call.1} parent=16 // loop_header
            %s18 = sphi 0, %s22
            %p19 = scmp.ge.s32.totalorder %s18, 1
            %s23 = sphi %s8, %s8
            %s24 = sphi [#allocation2], [#allocation2]
          $region20: #{tpu_custom_call.1} parent=16 // loop_header_branch
            %21 = sbr.rel (%p19) target = $region24
          $region21: #{tpu_custom_call.1} parent=16 // loop_body
            %v25 = vld [vmem:[%s23] sm:%s16]
            %26 = vst [vmem:[%s24] sm:%s16] %v25
            %v27 = vld [vmem:[%s23 + $0x10] sm:%s16]
            %28 = vst [vmem:[%s24 + $0x8] sm:%s16] %v27
            %v29 = vld [vmem:[%s23 + $0x20] sm:%s16]
            %30 = vst [vmem:[%s24 + $0x10] sm:%s16] %v29
            %v31 = vld [vmem:[%s23 + $0x30] sm:%s16]
            %32 = vst [vmem:[%s24 + $0x18] sm:%s16] %v31
          $region22: #{tpu_custom_call.1} parent=16 // loop_footer
            %s22 = sadd.s32 1, %s18
          $region23: #{tpu_custom_call.1} parent=16 // loop_footer_branch
            %17 = sbr.rel target = $region19
          $region24: #{tpu_custom_call.1} parent=16 // loop_exit
            _
        $region17: #{tpu_custom_call.1} parent=8 // pred_fallthru
          _
      $region9: #{tpu_custom_call.1} parent=4 // pred_fallthru
        _
      %53 = vnop
    $region5: #{tpu_custom_call.1} parent=1 // pred_fallthru
      _
    // Predicated region
    $region40: #{tpu_custom_call.1} parent=1 // pred_check
      _
    $region41: #{tpu_custom_call.1} parent=1 // pred_check_branch
      %55 = sbr.rel (0) target = $region43
    $region42: #{tpu_custom_call.1} parent=1 // pred_region
      _
    $region43: #{tpu_custom_call.1} parent=1 // pred_fallthru
      _
    %v56 = vld [vmem:[#allocation2 + $0x7] sm:$0x1]
    %v57 = vld [vmem:[#allocation2 + $0xf] sm:$0x1]
    %v58 = vld [vmem:[#allocation2 + $0x17] sm:$0x1]
    %v59 = vld [vmem:[#allocation2 + $0x1f] sm:$0x1]
    %v60 = vsub.f32 %v56, 0.0457
    %v61 = vsub.f32 %v57, 0.0457
    %v62 = vsub.f32 %v58, 0.0457
    %v63 = vsub.f32 %v59, 0.0457
    %v64 = vmul.f32 %v60, %v60
    %v65 = vmul.f32 %v61, %v61
    %v66 = vmul.f32 %v62, %v62
    %v67 = vmul.f32 %v63, %v63
    %v68 = vsub.f32 0.0, %v64
    %v69 = vsub.f32 0.0, %v65
    %v70 = vsub.f32 0.0, %v66
    %v71 = vsub.f32 0.0, %v67
    %v76 = vrot.slane %v69, 7
    %vm77 = vcmask 1041409
    %v78 = vsel %vm77, %v76, %v68
    %v79 = vrot.slane %v70, 6
    %vm80 = vcmask 1042434
    %v81 = vsel %vm80, %v79, %v78
    %v82 = vrot.slane %v71, 5
    %vm83 = vcmask 1043459
    %v84 = vsel %vm83, %v82, %v81
    %85 = vrot.lane.b32.xlu0 %v84, 125
    %v86 = vpop.permute.xlu0 %85
    %vm88 = vcmask 3072
    %89 = vst.msk [vmem:[%s1] sm:$0xf] %vm88, %v86
    // Predicated region
    $region44: #{tpu_custom_call.1} parent=1 // pred_check
      _
    $region45: #{tpu_custom_call.1} parent=1 // pred_check_branch
      %91 = sbr.rel (0) target = $region47
    $region46: #{tpu_custom_call.1} parent=1 // pred_region
      _
    $region47: #{tpu_custom_call.1} parent=1 // pred_fallthru
      _
    // Predicated region
    $region48: #{tpu_custom_call.1} parent=1 // pred_check
      _
    $region49: #{tpu_custom_call.1} parent=1 // pred_check_branch
      %93 = sbr.rel (0) target = $region51
    $region50: #{tpu_custom_call.1} parent=1 // pred_region
      _
    $region51: #{tpu_custom_call.1} parent=1 // pred_fallthru
      _

</llo_original>
